<compile_context>
chip_gen: v7x
topology: tpu7x:2x2x1
jax: 0.10.0
libtpu: 0.0.40
codegen_flags: <defaults>
</compile_context>

<pallas_src>
import jax
import jax.numpy as jnp
from jax.experimental import pallas as pl
from jax.experimental.pallas import tpu as pltpu


def _round_up(n, m):
    return ((n + m - 1) // m) * m


# -----------------------------------------------------------------------------
# Kernel
# -----------------------------------------------------------------------------
def spatial_kernel(x_ref, cw_ref, cb_ref, w1_ref, b1_ref, w2_ref, b2_ref,
                   w3_ref, b3_ref, w4_ref, b4_ref, o_ref):
    f32 = jnp.float32
    bf16 = jnp.bfloat16

    def dense_relu(h, w_ref, b_ref):
        # bf16 operands on the MXU, f32 accumulation; bias + ReLU in f32 on VPU.
        acc = jnp.dot(h.astype(bf16), w_ref[...], preferred_element_type=f32)
        return jnp.maximum(acc + b_ref[...], 0.0)

    h = dense_relu(x_ref[...], cw_ref, cb_ref)   # Conv2d(1x1 out) + folded BN2d + ReLU
    h = dense_relu(h, w1_ref, b1_ref)            # Linear(Cout, 2C) + ReLU
    h = dense_relu(h, w2_ref, b2_ref)            # Linear(2C, C) + folded BN1d + ReLU
    h = dense_relu(h, w3_ref, b3_ref)            # Linear(C, C/2) + ReLU
    h = dense_relu(h, w4_ref, b4_ref)            # Linear(C/2, output_size) + ReLU
    o_ref[...] = h.astype(o_ref.dtype)


# -----------------------------------------------------------------------------
# Parameters (synthetic, matching SpatialModel.__init__ shapes)
# -----------------------------------------------------------------------------
def init_params(key, spatial_radius, channel_size, output_size):
    k = spatial_radius * 2 + 1
    c_out = int(channel_size * 1.5)
    c2 = channel_size * 2
    c1 = channel_size
    ch = int(channel_size * 0.5)

    keys = jax.random.split(key, 20)
    f32 = jnp.float32

    def w(key, shape, scale=0.1):
        return jax.random.normal(key, shape, dtype=f32) * scale

    return dict(
        conv_w=w(keys[0], (c_out, channel_size, k, k)),       # PyTorch (Cout, Cin, K, K)
        conv_b=w(keys[1], (c_out,)),
        bn2d_gamma=jax.random.uniform(keys[2], (c_out,), f32, 0.5, 1.5),
        bn2d_beta=w(keys[3], (c_out,)),
        bn2d_mean=w(keys[4], (c_out,)),
        bn2d_var=jax.random.uniform(keys[5], (c_out,), f32, 0.5, 1.5),
        lin1_w=w(keys[6], (c2, c_out)),                       # PyTorch Linear: (out, in)
        lin1_b=w(keys[7], (c2,)),
        lin2_w=w(keys[8], (c1, c2)),
        lin2_b=w(keys[9], (c1,)),
        bn1d_gamma=jax.random.uniform(keys[10], (c1,), f32, 0.5, 1.5),
        bn1d_beta=w(keys[11], (c1,)),
        bn1d_mean=w(keys[12], (c1,)),
        bn1d_var=jax.random.uniform(keys[13], (c1,), f32, 0.5, 1.5),
        lin3_w=w(keys[14], (ch, c1)),
        lin3_b=w(keys[15], (ch,)),
        lin4_w=w(keys[16], (output_size, ch)),
        lin4_b=w(keys[17], (output_size,)),
    )


def _fold_bn(gamma, beta, mean, var, eps=1e-5):
    scale = gamma / jnp.sqrt(var + eps)
    shift = beta - mean * scale
    return scale, shift


def prepare_operands(params):
    """One-time weight algebra: fold eval-mode BN into the neighboring matmul,
    transpose to (in, out) layout, cast matmul weights to bf16 (biases f32)."""
    c_out = params["conv_w"].shape[0]
    s2d, t2d = _fold_bn(params["bn2d_gamma"], params["bn2d_beta"],
                        params["bn2d_mean"], params["bn2d_var"])
    s1d, t1d = _fold_bn(params["bn1d_gamma"], params["bn1d_beta"],
                        params["bn1d_mean"], params["bn1d_var"])

    cw = params["conv_w"].reshape(c_out, -1).T * s2d[None, :]   # (Cin*K*K, Cout), BN folded
    cb = params["conv_b"] * s2d + t2d
    w2 = params["lin2_w"].T * s1d[None, :]                      # (2C, C), BN1d folded
    b2 = params["lin2_b"] * s1d + t1d

    bf = lambda a: jnp.asarray(a, jnp.bfloat16)
    row = lambda v: jnp.asarray(v, jnp.float32).reshape(1, -1)

    return (
        bf(cw), row(cb),
        bf(params["lin1_w"].T), row(params["lin1_b"]),
        bf(w2), row(b2),
        bf(params["lin3_w"].T), row(params["lin3_b"]),
        bf(params["lin4_w"].T), row(params["lin4_b"]),
    )


# -----------------------------------------------------------------------------
# Forward (Pallas)
# -----------------------------------------------------------------------------
_VMEM_LIMIT_BYTES = 32 * 1024 * 1024     # safe scoped limit on v5e/v6e/v7x
_X_STREAM_BUDGET = 12 * 1024 * 1024      # double-buffered x tiles stay under this


def _pick_batch_tile(batch_tile, B, feat_in, x_itemsize):
    """Large, 8-aligned batch tile whose double-buffered VMEM footprint fits."""
    padded_feat = _round_up(max(feat_in, 1), 128)          # VMEM lane padding
    per_row = padded_feat * x_itemsize
    cap = max(8, (_X_STREAM_BUDGET // (2 * per_row)) // 8 * 8)
    tb = min(batch_tile, cap, _round_up(B, 8))
    return max(8, tb // 8 * 8)


def spatial_model_forward(x, prepared, output_size, *, batch_tile=1024):
    """x: (B, Cin, H, W) with H = W = conv kernel size (NCHW, like PyTorch)."""
    assert batch_tile % 8 == 0, "batch_tile must be a multiple of 8 (sublane)"
    B = x.shape[0]
    feat_in = x.shape[1] * x.shape[2] * x.shape[3]
    # NCHW flatten is a free view (contiguous); keep native dtype — the kernel
    # casts to bf16 on the VPU, avoiding an extra HBM round trip here.
    x_flat = x.reshape(B, feat_in)

    tb = _pick_batch_tile(batch_tile, B, feat_in, x_flat.dtype.itemsize)
    b_pad = _round_up(B, tb)
    if b_pad != B:
        x_flat = jnp.pad(x_flat, ((0, b_pad - B), (0, 0)))

    grid = (b_pad // tb,)

    def const_spec(arr):
        # Whole-array block, same block every step -> stays VMEM-resident.
        return pl.BlockSpec(arr.shape, lambda i: (0, 0))

    in_specs = [pl.BlockSpec((tb, feat_in), lambda i: (i, 0))]
    in_specs += [const_spec(w) for w in prepared]
    out_specs = pl.BlockSpec((tb, output_size), lambda i: (i, 0))

    out = pl.pallas_call(
        spatial_kernel,
        out_shape=jax.ShapeDtypeStruct((b_pad, output_size), jnp.float32),
        grid=grid,
        in_specs=in_specs,
        out_specs=out_specs,
        compiler_params=pltpu.CompilerParams(
            dimension_semantics=("parallel",),       # megacore-shard the batch axis
            vmem_limit_bytes=_VMEM_LIMIT_BYTES,
        ),
    )(x_flat, *prepared)
    return out[:B]


# -----------------------------------------------------------------------------
# Pure-JAX f32 reference (mirrors PyTorch forward, eval-mode BN)
# -----------------------------------------------------------------------------
def reference_forward(x, params, output_size):
    B = x.shape[0]
    x_flat = x.reshape(B, -1)
    c_out = params["conv_w"].shape[0]
    h = x_flat @ params["conv_w"].reshape(c_out, -1).T + params["conv_b"]
    s2d, t2d = _fold_bn(params["bn2d_gamma"], params["bn2d_beta"],
                        params["bn2d_mean"], params["bn2d_var"])
    h = jnp.maximum(h * s2d + t2d, 0.0)
    h = jnp.maximum(h @ params["lin1_w"].T + params["lin1_b"], 0.0)
    h = h @ params["lin2_w"].T + params["lin2_b"]
    s1d, t1d = _fold_bn(params["bn1d_gamma"], params["bn1d_beta"],
                        params["bn1d_mean"], params["bn1d_var"])
    h = jnp.maximum(h * s1d + t1d, 0.0)
    h = jnp.maximum(h @ params["lin3_w"].T + params["lin3_b"], 0.0)
    h = jnp.maximum(h @ params["lin4_w"].T + params["lin4_b"], 0.0)
    return h


if __name__ == "__main__":
    # Shapes consistent with the forward pass: the flatten feeding
    # Linear(int(1.5*C), ...) forces conv output spatial = 1x1,
    # i.e. input H = W = spatial_radius*2 + 1.
    channel_size = 8
    spatial_radius = 1                 # kernel = 3x3 -> input spatial = 3x3
    output_size = 1
    k = spatial_radius * 2 + 1

    key = jax.random.PRNGKey(0)
    key_x, key_p, key_x2 = jax.random.split(key, 3)
    params = init_params(key_p, spatial_radius, channel_size, output_size)
    prepared = prepare_operands(params)   # one-time: fold BN, transpose, bf16

    # Small case (single grid step, batch padded to 8).
    batch = 2
    x = jax.random.normal(key_x, (batch, channel_size, k, k), dtype=jnp.float32)
    out = jax.block_until_ready(spatial_model_forward(x, prepared, output_size))
    ref = reference_forward(x, params, output_size)
    assert out.shape == (batch, output_size)
    assert jnp.allclose(out, ref, atol=1e-2, rtol=5e-2), (out, ref)

    # Multi-step grid + padding path (exercises pipelining and the
    # VMEM-resident constant-index weight specs).
    batch2 = 260
    x2 = jax.random.normal(key_x2, (batch2, channel_size, k, k), dtype=jnp.float32)
    out2 = jax.block_until_ready(
        spatial_model_forward(x2, prepared, output_size, batch_tile=128))
    ref2 = reference_forward(x2, params, output_size)
    assert out2.shape == (batch2, output_size)
    assert jnp.allclose(out2, ref2, atol=1e-2, rtol=5e-2)

    print("KERNEL_OK")
</pallas_src>

<mosaic_0001>
module attributes {stable_mosaic.version = 11 : i64} {
  func.func @spatial_kernel(%arg0: i32, %arg1: memref<8x72xf32, #tpu.memory_space<vmem>>, %arg2: memref<72x12xbf16, #tpu.memory_space<vmem>>, %arg3: memref<1x12xf32, #tpu.memory_space<vmem>>, %arg4: memref<12x16xbf16, #tpu.memory_space<vmem>>, %arg5: memref<1x16xf32, #tpu.memory_space<vmem>>, %arg6: memref<16x8xbf16, #tpu.memory_space<vmem>>, %arg7: memref<1x8xf32, #tpu.memory_space<vmem>>, %arg8: memref<8x4xbf16, #tpu.memory_space<vmem>>, %arg9: memref<1x4xf32, #tpu.memory_space<vmem>>, %arg10: memref<4x1xbf16, #tpu.memory_space<vmem>>, %arg11: memref<1x1xf32, #tpu.memory_space<vmem>>, %arg12: memref<8x1xf32, #tpu.memory_space<vmem>>) attributes {dimension_semantics = [#tpu.dimension_semantics<parallel>], iteration_bounds = array<i64: 1>, scalar_prefetch = 0 : i64, scratch_operands = 0 : i64, tpu.core_type = #tpu.core_type<tc>, window_params = [{transform_indices = @transform_0, window_bounds = array<i64: 8, 72>}, {pipeline_mode = #tpu.pipeline_mode<synchronous>, transform_indices = @transform_1, window_bounds = array<i64: 72, 12>}, {pipeline_mode = #tpu.pipeline_mode<synchronous>, transform_indices = @transform_2, window_bounds = array<i64: 1, 12>}, {pipeline_mode = #tpu.pipeline_mode<synchronous>, transform_indices = @transform_3, window_bounds = array<i64: 12, 16>}, {pipeline_mode = #tpu.pipeline_mode<synchronous>, transform_indices = @transform_4, window_bounds = array<i64: 1, 16>}, {pipeline_mode = #tpu.pipeline_mode<synchronous>, transform_indices = @transform_5, window_bounds = array<i64: 16, 8>}, {pipeline_mode = #tpu.pipeline_mode<synchronous>, transform_indices = @transform_6, window_bounds = array<i64: 1, 8>}, {pipeline_mode = #tpu.pipeline_mode<synchronous>, transform_indices = @transform_7, window_bounds = array<i64: 8, 4>}, {pipeline_mode = #tpu.pipeline_mode<synchronous>, transform_indices = @transform_8, window_bounds = array<i64: 1, 4>}, {pipeline_mode = #tpu.pipeline_mode<synchronous>, transform_indices = @transform_9, window_bounds = array<i64: 4, 1>}, {pipeline_mode = #tpu.pipeline_mode<synchronous>, transform_indices = @transform_10, window_bounds = array<i64: 1, 1>}, {transform_indices = @transform_11, window_bounds = array<i64: 8, 1>}]} {
    %c0 = arith.constant 0 : index
    %c0_0 = arith.constant 0 : index
    %0 = vector.load %arg1[%c0, %c0_0] : memref<8x72xf32, #tpu.memory_space<vmem>>, vector<8x72xf32>
    %1 = arith.truncf %0 : vector<8x72xf32> to vector<8x72xbf16>
    %c0_1 = arith.constant 0 : index
    %c0_2 = arith.constant 0 : index
    %2 = vector.load %arg2[%c0_1, %c0_2] : memref<72x12xbf16, #tpu.memory_space<vmem>>, vector<72x12xbf16>
    %cst = arith.constant dense<0.000000e+00> : vector<8x12xf32>
    %3 = tpu.matmul %1, %2, %cst {dimension_numbers = #tpu.dot_dimension_numbers<[1], [0], [0], [1], [0, 0, 1, 1], [], []>} : vector<8x72xbf16>, vector<72x12xbf16>, vector<8x12xf32> -> vector<8x12xf32>
    %c0_3 = arith.constant 0 : index
    %c0_4 = arith.constant 0 : index
    %4 = vector.load %arg3[%c0_3, %c0_4] : memref<1x12xf32, #tpu.memory_space<vmem>>, vector<1x12xf32>
    %5 = vector.broadcast %4 : vector<1x12xf32> to vector<8x12xf32>
    %6 = arith.addf %3, %5 : vector<8x12xf32>
    %cst_5 = arith.constant 0.000000e+00 : f32
    %7 = vector.broadcast %cst_5 : f32 to vector<8x12xf32>
    %8 = arith.maximumf %6, %7 : vector<8x12xf32>
    %9 = arith.truncf %8 : vector<8x12xf32> to vector<8x12xbf16>
    %c0_6 = arith.constant 0 : index
    %c0_7 = arith.constant 0 : index
    %10 = vector.load %arg4[%c0_6, %c0_7] : memref<12x16xbf16, #tpu.memory_space<vmem>>, vector<12x16xbf16>
    %cst_8 = arith.constant dense<0.000000e+00> : vector<8x16xf32>
    %11 = tpu.matmul %9, %10, %cst_8 {dimension_numbers = #tpu.dot_dimension_numbers<[1], [0], [0], [1], [0, 0, 1, 1], [], []>} : vector<8x12xbf16>, vector<12x16xbf16>, vector<8x16xf32> -> vector<8x16xf32>
    %c0_9 = arith.constant 0 : index
    %c0_10 = arith.constant 0 : index
    %12 = vector.load %arg5[%c0_9, %c0_10] : memref<1x16xf32, #tpu.memory_space<vmem>>, vector<1x16xf32>
    %13 = vector.broadcast %12 : vector<1x16xf32> to vector<8x16xf32>
    %14 = arith.addf %11, %13 : vector<8x16xf32>
    %cst_11 = arith.constant 0.000000e+00 : f32
    %15 = vector.broadcast %cst_11 : f32 to vector<8x16xf32>
    %16 = arith.maximumf %14, %15 : vector<8x16xf32>
    %17 = arith.truncf %16 : vector<8x16xf32> to vector<8x16xbf16>
    %c0_12 = arith.constant 0 : index
    %c0_13 = arith.constant 0 : index
    %18 = vector.load %arg6[%c0_12, %c0_13] : memref<16x8xbf16, #tpu.memory_space<vmem>>, vector<16x8xbf16>
    %cst_14 = arith.constant dense<0.000000e+00> : vector<8x8xf32>
    %19 = tpu.matmul %17, %18, %cst_14 {dimension_numbers = #tpu.dot_dimension_numbers<[1], [0], [0], [1], [0, 0, 1, 1], [], []>} : vector<8x16xbf16>, vector<16x8xbf16>, vector<8x8xf32> -> vector<8x8xf32>
    %c0_15 = arith.constant 0 : index
    %c0_16 = arith.constant 0 : index
    %20 = vector.load %arg7[%c0_15, %c0_16] : memref<1x8xf32, #tpu.memory_space<vmem>>, vector<1x8xf32>
    %21 = vector.broadcast %20 : vector<1x8xf32> to vector<8x8xf32>
    %22 = arith.addf %19, %21 : vector<8x8xf32>
    %cst_17 = arith.constant 0.000000e+00 : f32
    %23 = vector.broadcast %cst_17 : f32 to vector<8x8xf32>
    %24 = arith.maximumf %22, %23 : vector<8x8xf32>
    %25 = arith.truncf %24 : vector<8x8xf32> to vector<8x8xbf16>
    %c0_18 = arith.constant 0 : index
    %c0_19 = arith.constant 0 : index
    %26 = vector.load %arg8[%c0_18, %c0_19] : memref<8x4xbf16, #tpu.memory_space<vmem>>, vector<8x4xbf16>
    %cst_20 = arith.constant dense<0.000000e+00> : vector<8x4xf32>
    %27 = tpu.matmul %25, %26, %cst_20 {dimension_numbers = #tpu.dot_dimension_numbers<[1], [0], [0], [1], [0, 0, 1, 1], [], []>} : vector<8x8xbf16>, vector<8x4xbf16>, vector<8x4xf32> -> vector<8x4xf32>
    %c0_21 = arith.constant 0 : index
    %c0_22 = arith.constant 0 : index
    %28 = vector.load %arg9[%c0_21, %c0_22] : memref<1x4xf32, #tpu.memory_space<vmem>>, vector<1x4xf32>
    %29 = vector.broadcast %28 : vector<1x4xf32> to vector<8x4xf32>
    %30 = arith.addf %27, %29 : vector<8x4xf32>
    %cst_23 = arith.constant 0.000000e+00 : f32
    %31 = vector.broadcast %cst_23 : f32 to vector<8x4xf32>
    %32 = arith.maximumf %30, %31 : vector<8x4xf32>
    %33 = arith.truncf %32 : vector<8x4xf32> to vector<8x4xbf16>
    %c0_24 = arith.constant 0 : index
    %c0_25 = arith.constant 0 : index
    %34 = vector.load %arg10[%c0_24, %c0_25] : memref<4x1xbf16, #tpu.memory_space<vmem>>, vector<4x1xbf16>
    %cst_26 = arith.constant dense<0.000000e+00> : vector<8x1xf32>
    %35 = tpu.matmul %33, %34, %cst_26 {dimension_numbers = #tpu.dot_dimension_numbers<[1], [0], [0], [1], [0, 0, 1, 1], [], []>} : vector<8x4xbf16>, vector<4x1xbf16>, vector<8x1xf32> -> vector<8x1xf32>
    %c0_27 = arith.constant 0 : index
    %c0_28 = arith.constant 0 : index
    %36 = vector.load %arg11[%c0_27, %c0_28] : memref<1x1xf32, #tpu.memory_space<vmem>>, vector<1x1xf32>
    %37 = vector.broadcast %36 : vector<1x1xf32> to vector<8x1xf32>
    %38 = arith.addf %35, %37 : vector<8x1xf32>
    %cst_29 = arith.constant 0.000000e+00 : f32
    %39 = vector.broadcast %cst_29 : f32 to vector<8x1xf32>
    %40 = arith.maximumf %38, %39 : vector<8x1xf32>
    %c0_30 = arith.constant 0 : index
    %c0_31 = arith.constant 0 : index
    %41 = vector.load %arg12[%c0_30, %c0_31] : memref<8x1xf32, #tpu.memory_space<vmem>>, vector<8x1xf32>
    tpu.vector_store %arg12[%c0_30, %c0_31], %40 {strides = array<i32>} : memref<8x1xf32, #tpu.memory_space<vmem>>, vector<8x1xf32>,
    return
  }
  func.func @transform_0(%arg0: i32) -> (i32, i32) {
    %c0_i32 = arith.constant 0 : i32
    %c0_i32_0 = arith.constant 0 : i32
    return %arg0, %c0_i32 : i32, i32
  }
  func.func @transform_1(%arg0: i32) -> (i32, i32) {
    %c0_i32 = arith.constant 0 : i32
    %c0_i32_0 = arith.constant 0 : i32
    %c0_i32_1 = arith.constant 0 : i32
    return %c0_i32, %c0_i32_0 : i32, i32
  }
  func.func @transform_2(%arg0: i32) -> (i32, i32) {
    %c0_i32 = arith.constant 0 : i32
    %c0_i32_0 = arith.constant 0 : i32
    %c0_i32_1 = arith.constant 0 : i32
    return %c0_i32, %c0_i32_0 : i32, i32
  }
  func.func @transform_3(%arg0: i32) -> (i32, i32) {
    %c0_i32 = arith.constant 0 : i32
    %c0_i32_0 = arith.constant 0 : i32
    %c0_i32_1 = arith.constant 0 : i32
    return %c0_i32, %c0_i32_0 : i32, i32
  }
  func.func @transform_4(%arg0: i32) -> (i32, i32) {
    %c0_i32 = arith.constant 0 : i32
    %c0_i32_0 = arith.constant 0 : i32
    %c0_i32_1 = arith.constant 0 : i32
    return %c0_i32, %c0_i32_0 : i32, i32
  }
  func.func @transform_5(%arg0: i32) -> (i32, i32) {
    %c0_i32 = arith.constant 0 : i32
    %c0_i32_0 = arith.constant 0 : i32
    %c0_i32_1 = arith.constant 0 : i32
    return %c0_i32, %c0_i32_0 : i32, i32
  }
  func.func @transform_6(%arg0: i32) -> (i32, i32) {
    %c0_i32 = arith.constant 0 : i32
    %c0_i32_0 = arith.constant 0 : i32
    %c0_i32_1 = arith.constant 0 : i32
    return %c0_i32, %c0_i32_0 : i32, i32
  }
  func.func @transform_7(%arg0: i32) -> (i32, i32) {
    %c0_i32 = arith.constant 0 : i32
    %c0_i32_0 = arith.constant 0 : i32
    %c0_i32_1 = arith.constant 0 : i32
    return %c0_i32, %c0_i32_0 : i32, i32
  }
  func.func @transform_8(%arg0: i32) -> (i32, i32) {
    %c0_i32 = arith.constant 0 : i32
    %c0_i32_0 = arith.constant 0 : i32
    %c0_i32_1 = arith.constant 0 : i32
    return %c0_i32, %c0_i32_0 : i32, i32
  }
  func.func @transform_9(%arg0: i32) -> (i32, i32) {
    %c0_i32 = arith.constant 0 : i32
    %c0_i32_0 = arith.constant 0 : i32
    %c0_i32_1 = arith.constant 0 : i32
    return %c0_i32, %c0_i32_0 : i32, i32
  }
  func.func @transform_10(%arg0: i32) -> (i32, i32) {
    %c0_i32 = arith.constant 0 : i32
    %c0_i32_0 = arith.constant 0 : i32
    %c0_i32_1 = arith.constant 0 : i32
    return %c0_i32, %c0_i32_0 : i32, i32
  }
  func.func @transform_11(%arg0: i32) -> (i32, i32) {
    %c0_i32 = arith.constant 0 : i32
    %c0_i32_0 = arith.constant 0 : i32
    return %arg0, %c0_i32 : i32, i32
  }
}

</mosaic_0001>

<llo_original>
// kernel: tpu_custom_call.1
$region0: #{tpu_custom_call.1}
  #allocation0 [shape = 'u32[]', space=smem, size = 0x4, offset = 0x4, fixed_abs, tag = 'smem constant byte address 0x4 - core index']
  #allocation1 [shape = 'u32[144,128]{1,0:T(1,128)}', space=vmem, size = 0x12000, scoped, tag = 'internal scratch']
  #allocation2 [shape = 'f32[1,1]{1,0:T(1,128)S(1)}', space=vmem, size = 0x200, scoped, tag = 'scoped memory for tpu_custom_call.1']
  %s0 = inlined_call_operand.vmem [shape: f32[8,72], index: 0, kind: input, shape index: {}]
  %s1 = inlined_call_operand.vmem [shape: bf16[72,12], index: 1, kind: input, shape index: {}]
  %s2 = inlined_call_operand.vmem [shape: f32[1,12], index: 2, kind: input, shape index: {}]
  %s3 = inlined_call_operand.vmem [shape: bf16[12,16], index: 3, kind: input, shape index: {}]
  %s4 = inlined_call_operand.vmem [shape: f32[1,16], index: 4, kind: input, shape index: {}]
  %s5 = inlined_call_operand.vmem [shape: bf16[16,8], index: 5, kind: input, shape index: {}]
  %s6 = inlined_call_operand.vmem [shape: f32[1,8], index: 6, kind: input, shape index: {}]
  %s7 = inlined_call_operand.vmem [shape: bf16[8,4], index: 7, kind: input, shape index: {}]
  %s8 = inlined_call_operand.vmem [shape: f32[1,4], index: 8, kind: input, shape index: {}]
  %s9 = inlined_call_operand.vmem [shape: bf16[4,1], index: 9, kind: input, shape index: {}]
  %s10 = inlined_call_operand.<no memory space> [shape: f32[1,1], index: 10, kind: input, shape index: {}]
  %s11 = inlined_call_operand.vmem [shape: f32[8,1], index: 11, kind: output, shape index: {}]
  %s12 = sld [smem:[#allocation0]]
  $region54: #{tpu_custom_call.1} parent=0
    _
  %s14 = ssub.s32 1, %s12
  %s15 = scalar_select 0, %s14, %s12
  %v16 = vstv %s10
  %17 = vst [vmem:[#allocation2] sm:$0x1] %v16
  // Predicated region
  $region2: #{tpu_custom_call.1} parent=0 // pred_check
    _
  $region3: #{tpu_custom_call.1} parent=0 // pred_check_branch
    %19 = sbr.rel (0) target = $region5
  $region4: #{tpu_custom_call.1} parent=0 // pred_region
    _
  $region5: #{tpu_custom_call.1} parent=0 // pred_fallthru
    _
  // Predicated region
  $region6: #{tpu_custom_call.1} parent=0 // pred_check
    _
  $region7: #{tpu_custom_call.1} parent=0 // pred_check_branch
    %21 = sbr.rel (0) target = $region9
  $region8: #{tpu_custom_call.1} parent=0 // pred_region
    _
  $region9: #{tpu_custom_call.1} parent=0 // pred_fallthru
    _
  // Predicated region
  $region10: #{tpu_custom_call.1} parent=0 // pred_check
    _
  $region11: #{tpu_custom_call.1} parent=0 // pred_check_branch
    %23 = sbr.rel (0) target = $region13
  $region12: #{tpu_custom_call.1} parent=0 // pred_region
    _
  $region13: #{tpu_custom_call.1} parent=0 // pred_fallthru
    _
  // Predicated region
  $region14: #{tpu_custom_call.1} parent=0 // pred_check
    _
  $region15: #{tpu_custom_call.1} parent=0 // pred_check_branch
    %25 = sbr.rel (0) target = $region17
  $region16: #{tpu_custom_call.1} parent=0 // pred_region
    _
  $region17: #{tpu_custom_call.1} parent=0 // pred_fallthru
    _
  // Predicated region
  $region18: #{tpu_custom_call.1} parent=0 // pred_check
    _
  $region19: #{tpu_custom_call.1} parent=0 // pred_check_branch
    %27 = sbr.rel (0) target = $region21
  $region20: #{tpu_custom_call.1} parent=0 // pred_region
    _
  $region21: #{tpu_custom_call.1} parent=0 // pred_fallthru
    _
  // Predicated region
  $region22: #{tpu_custom_call.1} parent=0 // pred_check
    _
  $region23: #{tpu_custom_call.1} parent=0 // pred_check_branch
    %29 = sbr.rel (0) target = $region25
  $region24: #{tpu_custom_call.1} parent=0 // pred_region
    _
  $region25: #{tpu_custom_call.1} parent=0 // pred_fallthru
    _
  // Predicated region
  $region26: #{tpu_custom_call.1} parent=0 // pred_check
    _
  $region27: #{tpu_custom_call.1} parent=0 // pred_check_branch
    %31 = sbr.rel (0) target = $region29
  $region28: #{tpu_custom_call.1} parent=0 // pred_region
    _
  $region29: #{tpu_custom_call.1} parent=0 // pred_fallthru
    _
  // Predicated region
  $region30: #{tpu_custom_call.1} parent=0 // pred_check
    _
  $region31: #{tpu_custom_call.1} parent=0 // pred_check_branch
    %33 = sbr.rel (0) target = $region33
  $region32: #{tpu_custom_call.1} parent=0 // pred_region
    _
  $region33: #{tpu_custom_call.1} parent=0 // pred_fallthru
    _
  // Predicated region
  $region34: #{tpu_custom_call.1} parent=0 // pred_check
    _
  $region35: #{tpu_custom_call.1} parent=0 // pred_check_branch
    %35 = sbr.rel (0) target = $region37
  $region36: #{tpu_custom_call.1} parent=0 // pred_region
    _
  $region37: #{tpu_custom_call.1} parent=0 // pred_fallthru
    _
  // Predicated region
  $region38: #{tpu_custom_call.1} parent=0 // pred_check
    _
  $region39: #{tpu_custom_call.1} parent=0 // pred_check_branch
    %37 = sbr.rel (0) target = $region41
  $region40: #{tpu_custom_call.1} parent=0 // pred_region
    _
  $region41: #{tpu_custom_call.1} parent=0 // pred_fallthru
    _
  // Predicated region
  $region42: #{tpu_custom_call.1} parent=0 // pred_check
    _
  $region43: #{tpu_custom_call.1} parent=0 // pred_check_branch
    %39 = sbr.rel (0) target = $region45
  $region44: #{tpu_custom_call.1} parent=0 // pred_region
    _
  $region45: #{tpu_custom_call.1} parent=0 // pred_fallthru
    _
  %v41 = vld [vmem:[%s0] sm:$0xff]
  %v42 = vpack.c.bf16 %v41, %v41
  %v43 = vld [vmem:[%s1] sm:$0xf]
  %v44 = vld [vmem:[%s1 + $0x4] sm:$0xf]
  %v45 = vld [vmem:[%s1 + $0x8] sm:$0xf]
  %v46 = vld [vmem:[%s1 + $0xc] sm:$0xf]
  %v47 = vld [vmem:[%s1 + $0x10] sm:$0xf]
  %v48 = vld [vmem:[%s1 + $0x14] sm:$0xf]
  %v49 = vld [vmem:[%s1 + $0x18] sm:$0xf]
  %v50 = vld [vmem:[%s1 + $0x1c] sm:$0xf]
  %v51 = vld [vmem:[%s1 + $0x20] sm:$0xf]
  %v52 = vld [vmem:[%s2] sm:$0x1]
  %v54 = vlaneseq
  %v55 = vshrl.u32 %v54, 7
  %v56 = vsub.s32 0, %v55
  %v57 = vrot.slane %v52, %v56
  %v68 = vunpack.c.l.b16 %v43
  %v69 = vunpack.c.l.b16 %v44
  %v70 = vunpack.c.l.b16 %v45
  %v71 = vunpack.c.l.b16 %v46
  %v72 = vunpack.c.l.b16 %v47
  %v73 = vunpack.c.l.b16 %v48
  %v74 = vunpack.c.l.b16 %v49
  %v75 = vunpack.c.l.b16 %v50
  %v76 = vunpack.c.l.b16 %v51
  %v77 = vpack.c.b16 %v69, %v68
  %v78 = vpack.c.b16 %v71, %v70
  %v79 = vpack.c.b16 %v73, %v72
  %v80 = vpack.c.b16 %v75, %v74
  %v81 = vpack.c.b16 %v76, %v76
  %vm86 = vcmask 588800
  %v88 = vsel %vm86, %v42, 0
  %vm90 = vcmask 1043456
  %v92 = vsel %vm90, %v81, 0
  %94 = vmatprep.subr.bf16.mxu0 0
  %95 = vmatpush1.bf16.msra.mxu0 %v77
  %96 = vmatprep.subr.bf16.mxu0 0
  %97 = vmatpush1.bf16.msra.mxu0 %v78
  %98 = vmatprep.subr.bf16.mxu0 0
  %99 = vmatpush1.bf16.msra.mxu0 %v79
  %100 = vmatprep.subr.bf16.mxu0 0
  %101 = vmatpush1.bf16.msra.mxu0 %v80
  %102 = vmatprep.subr.bf16.mxu0 0
  %103 = vmatpush1.bf16.msra.mxu0 %v92
  %104 = vmatprep.subr.bf16.mxu0 0
  %105 = vmatpush1.bf16.msra.mxu0 0
  %106 = vmatprep.subr.bf16.mxu0 0
  %107 = vmatpush1.bf16.msra.mxu0 0
  %108 = vmatprep.subr.bf16.mxu0 0
  %109 = vmatpush1.bf16.msra.mxu0 0
  %110 = vmatprep.subr.bf16.mxu0 0
  %111 = vmatpush1.bf16.msra.mxu0 0
  %112 = vmatprep.subr.bf16.mxu0 0
  %113 = vmatpush1.bf16.msra.mxu0 0
  %114 = vmatprep.subr.bf16.mxu0 0
  %115 = vmatpush1.bf16.msra.mxu0 0
  %116 = vmatprep.subr.bf16.mxu0 0
  %117 = vmatpush1.bf16.msra.mxu0 0
  %118 = vmatprep.subr.bf16.mxu0 0
  %119 = vmatpush1.bf16.msra.mxu0 0
  %120 = vmatprep.subr.bf16.mxu0 0
  %121 = vmatpush1.bf16.msra.mxu0 0
  %122 = vmatprep.subr.bf16.mxu0 0
  %123 = vmatpush1.bf16.msra.mxu0 0
  %124 = vmatprep.subr.bf16.mxu0 0
  %125 = vmatpush1.bf16.msra.mxu0 0
  %126 = vmatprep.mubr.bf16.mxu0 0
  %127 = vmatmul.mubr.bf16.gmra.mrb[0].mxu0 %v88
  %v128 = vpop.f32.mrb[0].mxu0
  %v129 = vadd.f32 %v57, %v128
  %v130 = vpop.f32.mrb[0].mxu0
  %v131 = vpop.f32.mrb[0].mxu0
  %v132 = vpop.f32.mrb[0].mxu0
  %133 = vdwg.mxu0
  %v134 = vmax.f32 %v129, 0.0
  %v135 = vpack.c.bf16 %v134, %v134
  %v136 = vld [vmem:[%s3] sm:$0xf]
  %v137 = vld [vmem:[%s3 + $0x4] sm:$0x3]
  %v138 = vld [vmem:[%s4] sm:$0x1]
  %v140 = vlaneseq
  %v141 = vshrl.u32 %v140, 7
  %v142 = vsub.s32 0, %v141
  %v143 = vrot.slane %v138, %v142
  %v147 = vunpack.c.l.b16 %v136
  %v148 = vunpack.c.l.b16 %v137
  %v149 = vpack.c.b16 %v148, %v147
  %vm150 = vcmask 97280
  %v152 = vsel %vm150, %v135, 0
  %vm154 = vcmask 1045504
  %v156 = vsel %vm154, %v149, 0
  %158 = vmatprep.subr.bf16.mxu0 0
  %159 = vmatpush1.bf16.msra.mxu0 %v156
  %160 = vmatprep.subr.bf16.mxu0 0
  %161 = vmatpush1.bf16.msra.mxu0 0
  %162 = vmatprep.subr.bf16.mxu0 0
  %163 = vmatpush1.bf16.msra.mxu0 0
  %164 = vmatprep.subr.bf16.mxu0 0
  %165 = vmatpush1.bf16.msra.mxu0 0
  %166 = vmatprep.subr.bf16.mxu0 0
  %167 = vmatpush1.bf16.msra.mxu0 0
  %168 = vmatprep.subr.bf16.mxu0 0
  %169 = vmatpush1.bf16.msra.mxu0 0
  %170 = vmatprep.subr.bf16.mxu0 0
  %171 = vmatpush1.bf16.msra.mxu0 0
  %172 = vmatprep.subr.bf16.mxu0 0
  %173 = vmatpush1.bf16.msra.mxu0 0
  %174 = vmatprep.subr.bf16.mxu0 0
  %175 = vmatpush1.bf16.msra.mxu0 0
  %176 = vmatprep.subr.bf16.mxu0 0
  %177 = vmatpush1.bf16.msra.mxu0 0
  %178 = vmatprep.subr.bf16.mxu0 0
  %179 = vmatpush1.bf16.msra.mxu0 0
  %180 = vmatprep.subr.bf16.mxu0 0
  %181 = vmatpush1.bf16.msra.mxu0 0
  %182 = vmatprep.subr.bf16.mxu0 0
  %183 = vmatpush1.bf16.msra.mxu0 0
  %184 = vmatprep.subr.bf16.mxu0 0
  %185 = vmatpush1.bf16.msra.mxu0 0
  %186 = vmatprep.subr.bf16.mxu0 0
  %187 = vmatpush1.bf16.msra.mxu0 0
  %188 = vmatprep.subr.bf16.mxu0 0
  %189 = vmatpush1.bf16.msra.mxu0 0
  %190 = vmatprep.mubr.bf16.mxu0 0
  %191 = vmatmul.mubr.bf16.gmra.mrb[0].mxu0 %v152
  %v192 = vpop.f32.mrb[0].mxu0
  %v193 = vadd.f32 %v143, %v192
  %v194 = vpop.f32.mrb[0].mxu0
  %v195 = vpop.f32.mrb[0].mxu0
  %v196 = vpop.f32.mrb[0].mxu0
  %197 = vdwg.mxu0
  %v198 = vmax.f32 %v193, 0.0
  %v199 = vpack.c.bf16 %v198, %v198
  %v200 = vld [vmem:[%s5] sm:$0xf]
  %v201 = vld [vmem:[%s5 + $0x4] sm:$0xf]
  %v202 = vld [vmem:[%s6] sm:$0x1]
  %v204 = vlaneseq
  %v205 = vshrl.u32 %v204, 7
  %v206 = vsub.s32 0, %v205
  %v207 = vrot.slane %v202, %v206
  %v211 = vunpack.c.l.b16 %v200
  %v212 = vunpack.c.l.b16 %v201
  %v213 = vpack.c.b16 %v212, %v211
  %vm215 = vcmask 130048
  %v217 = vsel %vm215, %v199, 0
  %219 = vmatprep.subr.bf16.mxu0 0
  %220 = vmatpush1.bf16.msra.mxu0 %v213
  %221 = vmatprep.subr.bf16.mxu0 0
  %222 = vmatpush1.bf16.msra.mxu0 0
  %223 = vmatprep.subr.bf16.mxu0 0
  %224 = vmatpush1.bf16.msra.mxu0 0
  %225 = vmatprep.subr.bf16.mxu0 0
  %226 = vmatpush1.bf16.msra.mxu0 0
  %227 = vmatprep.subr.bf16.mxu0 0
  %228 = vmatpush1.bf16.msra.mxu0 0
  %229 = vmatprep.subr.bf16.mxu0 0
  %230 = vmatpush1.bf16.msra.mxu0 0
  %231 = vmatprep.subr.bf16.mxu0 0
  %232 = vmatpush1.bf16.msra.mxu0 0
  %233 = vmatprep.subr.bf16.mxu0 0
  %234 = vmatpush1.bf16.msra.mxu0 0
  %235 = vmatprep.subr.bf16.mxu0 0
  %236 = vmatpush1.bf16.msra.mxu0 0
  %237 = vmatprep.subr.bf16.mxu0 0
  %238 = vmatpush1.bf16.msra.mxu0 0
  %239 = vmatprep.subr.bf16.mxu0 0
  %240 = vmatpush1.bf16.msra.mxu0 0
  %241 = vmatprep.subr.bf16.mxu0 0
  %242 = vmatpush1.bf16.msra.mxu0 0
  %243 = vmatprep.subr.bf16.mxu0 0
  %244 = vmatpush1.bf16.msra.mxu0 0
  %245 = vmatprep.subr.bf16.mxu0 0
  %246 = vmatpush1.bf16.msra.mxu0 0
  %247 = vmatprep.subr.bf16.mxu0 0
  %248 = vmatpush1.bf16.msra.mxu0 0
  %249 = vmatprep.subr.bf16.mxu0 0
  %250 = vmatpush1.bf16.msra.mxu0 0
  %251 = vmatprep.mubr.bf16.mxu0 0
  %252 = vmatmul.mubr.bf16.gmra.mrb[0].mxu0 %v217
  %v253 = vpop.f32.mrb[0].mxu0
  %v254 = vadd.f32 %v207, %v253
  %v255 = vpop.f32.mrb[0].mxu0
  %v256 = vpop.f32.mrb[0].mxu0
  %v257 = vpop.f32.mrb[0].mxu0
  %258 = vdwg.mxu0
  %v259 = vmax.f32 %v254, 0.0
  %v260 = vpack.c.bf16 %v259, %v259
  %v261 = vld [vmem:[%s7] sm:$0xf]
  %v262 = vld [vmem:[%s8] sm:$0x1]
  %v264 = vlaneseq
  %v265 = vshrl.u32 %v264, 7
  %v266 = vsub.s32 0, %v265
  %v267 = vrot.slane %v262, %v266
  %vm269 = vcmask 64512
  %v271 = vsel %vm269, %v260, 0
  %v274 = vsel %vm90, %v261, 0
  %276 = vmatprep.subr.bf16.mxu0 0
  %277 = vmatpush1.bf16.msra.mxu0 %v274
  %278 = vmatprep.subr.bf16.mxu0 0
  %279 = vmatpush1.bf16.msra.mxu0 0
  %280 = vmatprep.subr.bf16.mxu0 0
  %281 = vmatpush1.bf16.msra.mxu0 0
  %282 = vmatprep.subr.bf16.mxu0 0
  %283 = vmatpush1.bf16.msra.mxu0 0
  %284 = vmatprep.subr.bf16.mxu0 0
  %285 = vmatpush1.bf16.msra.mxu0 0
  %286 = vmatprep.subr.bf16.mxu0 0
  %287 = vmatpush1.bf16.msra.mxu0 0
  %288 = vmatprep.subr.bf16.mxu0 0
  %289 = vmatpush1.bf16.msra.mxu0 0
  %290 = vmatprep.subr.bf16.mxu0 0
  %291 = vmatpush1.bf16.msra.mxu0 0
  %292 = vmatprep.subr.bf16.mxu0 0
  %293 = vmatpush1.bf16.msra.mxu0 0
  %294 = vmatprep.subr.bf16.mxu0 0
  %295 = vmatpush1.bf16.msra.mxu0 0
  %296 = vmatprep.subr.bf16.mxu0 0
  %297 = vmatpush1.bf16.msra.mxu0 0
  %298 = vmatprep.subr.bf16.mxu0 0
  %299 = vmatpush1.bf16.msra.mxu0 0
  %300 = vmatprep.subr.bf16.mxu0 0
  %301 = vmatpush1.bf16.msra.mxu0 0
  %302 = vmatprep.subr.bf16.mxu0 0
  %303 = vmatpush1.bf16.msra.mxu0 0
  %304 = vmatprep.subr.bf16.mxu0 0
  %305 = vmatpush1.bf16.msra.mxu0 0
  %306 = vmatprep.subr.bf16.mxu0 0
  %307 = vmatpush1.bf16.msra.mxu0 0
  %308 = vmatprep.mubr.bf16.mxu0 0
  %309 = vmatmul.mubr.bf16.gmra.mrb[0].mxu0 %v271
  %v310 = vpop.f32.mrb[0].mxu0
  %v311 = vadd.f32 %v267, %v310
  %v312 = vpop.f32.mrb[0].mxu0
  %v313 = vpop.f32.mrb[0].mxu0
  %v314 = vpop.f32.mrb[0].mxu0
  %315 = vdwg.mxu0
  %v316 = vmax.f32 %v311, 0.0
  %v317 = vpack.c.bf16 %v316, %v316
  %v318 = vld [vmem:[%s9] sm:$0x3]
  %v319 = vld [vmem:[#allocation2] sm:$0x1]
  %v321 = vlaneseq
  %v322 = vshrl.u32 %v321, 7
  %v323 = vsub.s32 0, %v322
  %v324 = vrot.slane %v319, %v323
  %vm326 = vcmask 31744
  %v328 = vsel %vm326, %v317, 0
  %vm330 = vcmask 1041408
  %v332 = vsel %vm330, %v318, 0
  %334 = vmatprep.subr.bf16.mxu0 0
  %335 = vmatpush1.bf16.msra.mxu0 %v332
  %336 = vmatprep.subr.bf16.mxu0 0
  %337 = vmatpush1.bf16.msra.mxu0 0
  %338 = vmatprep.subr.bf16.mxu0 0
  %339 = vmatpush1.bf16.msra.mxu0 0
  %340 = vmatprep.subr.bf16.mxu0 0
  %341 = vmatpush1.bf16.msra.mxu0 0
  %342 = vmatprep.subr.bf16.mxu0 0
  %343 = vmatpush1.bf16.msra.mxu0 0
  %344 = vmatprep.subr.bf16.mxu0 0
  %345 = vmatpush1.bf16.msra.mxu0 0
  %346 = vmatprep.subr.bf16.mxu0 0
  %347 = vmatpush1.bf16.msra.mxu0 0
  %348 = vmatprep.subr.bf16.mxu0 0
  %349 = vmatpush1.bf16.msra.mxu0 0
  %350 = vmatprep.subr.bf16.mxu0 0
  %351 = vmatpush1.bf16.msra.mxu0 0
  %352 = vmatprep.subr.bf16.mxu0 0
  %353 = vmatpush1.bf16.msra.mxu0 0
  %354 = vmatprep.subr.bf16.mxu0 0
  %355 = vmatpush1.bf16.msra.mxu0 0
  %356 = vmatprep.subr.bf16.mxu0 0
  %357 = vmatpush1.bf16.msra.mxu0 0
  %358 = vmatprep.subr.bf16.mxu0 0
  %359 = vmatpush1.bf16.msra.mxu0 0
  %360 = vmatprep.subr.bf16.mxu0 0
  %361 = vmatpush1.bf16.msra.mxu0 0
  %362 = vmatprep.subr.bf16.mxu0 0
  %363 = vmatpush1.bf16.msra.mxu0 0
  %364 = vmatprep.subr.bf16.mxu0 0
  %365 = vmatpush1.bf16.msra.mxu0 0
  %366 = vmatprep.mubr.bf16.mxu0 0
  %367 = vmatmul.mubr.bf16.gmra.mrb[0].mxu0 %v328
  %v368 = vpop.f32.mrb[0].mxu0
  %v369 = vadd.f32 %v324, %v368
  %v370 = vpop.f32.mrb[0].mxu0
  %v371 = vpop.f32.mrb[0].mxu0
  %v372 = vpop.f32.mrb[0].mxu0
  %373 = vdwg.mxu0
  %v374 = vmax.f32 %v369, 0.0
  %vm375 = vcmask 7168
  %376 = vst.msk [vmem:[%s11] sm:$0xff] %vm375, %v374
  // Predicated region
  $region46: #{tpu_custom_call.1} parent=0 // pred_check
    _
  $region47: #{tpu_custom_call.1} parent=0 // pred_check_branch
    %378 = sbr.rel (0) target = $region49
  $region48: #{tpu_custom_call.1} parent=0 // pred_region
    _
  $region49: #{tpu_custom_call.1} parent=0 // pred_fallthru
    _
  // Predicated region
  $region50: #{tpu_custom_call.1} parent=0 // pred_check
    _
  $region51: #{tpu_custom_call.1} parent=0 // pred_check_branch
    %380 = sbr.rel (0) target = $region53
  $region52: #{tpu_custom_call.1} parent=0 // pred_region
    _
  $region53: #{tpu_custom_call.1} parent=0 // pred_fallthru
    _

</llo_original>
